<compile_context>
chip_gen: v7x
topology: tpu7x:2x2x1
jax: 0.10.0
libtpu: 0.0.40
codegen_flags: <defaults>
</compile_context>

<pallas_src>
from functools import partial

import jax
import jax.numpy as jnp
from jax import lax
from jax.experimental import pallas as pl
from jax.experimental.pallas import tpu as pltpu

EPS = 1e-5  # nn.InstanceNorm2d default


def _activation(y, act):
    a = act.lower()
    if a == "relu":
        return jnp.maximum(y, 0.0)
    if a in ("leakyrelu", "prelu"):
        # TODO(synk): PReLU has a learnable per-channel slope; fixed 0.1 slope used here.
        return jnp.where(y >= 0, y, 0.1 * y)
    if a == "swish":
        return y * jax.nn.sigmoid(y)
    raise ValueError(f"unsupported activation: {act}")


def _conv3x3_kernel(p_ref, w_ref, g_ref, b_ref, o_ref, *, norm, act):
    """One batch element per grid step.

    p_ref: (1, 9*in_c, S)   stride-2 im2col patches, S = outH*outW (lanes)
    w_ref: (out_c, 9*in_c)  folded conv weight
    g_ref: (out_c, 1)       InstanceNorm gamma
    b_ref: (out_c, 1)       InstanceNorm beta
    o_ref: (1, out_c, S)
    """
    # ---- the whole 3x3 stride-2 conv as a single MXU GEMM (lane-dense N = S) ----
    acc = jnp.dot(w_ref[...], p_ref[0], preferred_element_type=jnp.float32)  # (out_c, S)

    # ---- InstanceNorm2d(affine=True): per-channel stats over spatial (lanes), f32 ----
    if norm == "instance":
        mean = jnp.mean(acc, axis=1, keepdims=True)                      # (out_c, 1)
        var = jnp.mean(jnp.square(acc - mean), axis=1, keepdims=True)    # biased variance
        y = (acc - mean) * lax.rsqrt(var + EPS)
        y = y * g_ref[...] + b_ref[...]
    elif norm == "identity":
        y = acc
    else:
        # TODO(synk): 'bn'/'group'/'lrn' norms from getNorm are not implemented here.
        raise ValueError(f"unsupported norm: {norm}")

    # ---- activation (VPU / EUP) ----
    o_ref[0] = _activation(y, act).astype(o_ref.dtype)


@partial(jax.jit, static_argnames=("stride", "norm", "act"))
def conv3x3_forward(x, w, gamma, beta, *, stride=2, norm="instance", act="leakyrelu"):
    """x: (N, in_c, H, W) f32 (NCHW, like PyTorch); w: (out_c, in_c, 3, 3);
    gamma/beta: (out_c,).  Returns (N, out_c, outH, outW) f32."""
    N, in_c, H, W = x.shape
    out_c = w.shape[0]
    outH = (H + 2 - 3) // stride + 1
    outW = (W + 2 - 3) // stride + 1
    S = outH * outW
    Kc = 9 * in_c

    # ---- wrapper-side layout plumbing (XLA): edge pad + stride-2 patch gather ----
    xp = jnp.pad(x, ((0, 0), (0, 0), (1, 1), (1, 1)), mode="edge")  # ReplicationPad2d(1)
    taps = []
    for ky in range(3):
        for kx in range(3):
            taps.append(
                xp[:, :,
                   ky:ky + stride * (outH - 1) + 1:stride,
                   kx:kx + stride * (outW - 1) + 1:stride])          # (N, in_c, outH, outW)
    patches = jnp.stack(taps, axis=1).reshape(N, Kc, S)              # (N, 9*in_c, outH*outW)

    # Fold the conv weight to match the (ky,kx)-major, ic-minor patch ordering.
    w_mat = jnp.transpose(w, (0, 2, 3, 1)).reshape(out_c, Kc).astype(jnp.float32)
    g = gamma.reshape(out_c, 1).astype(jnp.float32)
    b = beta.reshape(out_c, 1).astype(jnp.float32)

    flops = 2 * N * out_c * Kc * S + 10 * N * out_c * S
    transcendentals = N * out_c * (S if act.lower() == "swish" else 1)
    bytes_accessed = 4 * (patches.size + w_mat.size + g.size + b.size + N * out_c * S)

    out_flat = pl.pallas_call(
        partial(_conv3x3_kernel, norm=norm, act=act),
        out_shape=jax.ShapeDtypeStruct((N, out_c, S), jnp.float32),
        grid=(N,),
        in_specs=[
            pl.BlockSpec((1, Kc, S), lambda n: (n, 0, 0)),     # patches (per image)
            pl.BlockSpec((out_c, Kc), lambda n: (0, 0)),       # conv weight (constant)
            pl.BlockSpec((out_c, 1), lambda n: (0, 0)),        # gamma (constant)
            pl.BlockSpec((out_c, 1), lambda n: (0, 0)),        # beta (constant)
        ],
        out_specs=pl.BlockSpec((1, out_c, S), lambda n: (n, 0, 0)),
        compiler_params=pltpu.CompilerParams(dimension_semantics=("parallel",)),
        cost_estimate=pl.CostEstimate(flops=flops,
                                      transcendentals=transcendentals,
                                      bytes_accessed=bytes_accessed),
    )(patches, w_mat, g, b)

    return out_flat.reshape(N, out_c, outH, outW)


def ref_forward(x, w, gamma, beta, *, stride=2, norm="instance", act="leakyrelu"):
    """Pure-JAX reference mirroring the PyTorch forward (NCHW)."""
    xp = jnp.pad(x, ((0, 0), (0, 0), (1, 1), (1, 1)), mode="edge")
    N, in_c, Hp, Wp = xp.shape
    out_c = w.shape[0]
    outH = (Hp - 3) // stride + 1
    outW = (Wp - 3) // stride + 1
    acc = jnp.zeros((N, out_c, outH, outW), jnp.float32)
    for ky in range(3):
        for kx in range(3):
            tap = xp[:, :,
                     ky:ky + stride * (outH - 1) + 1:stride,
                     kx:kx + stride * (outW - 1) + 1:stride]
            acc = acc + jnp.einsum("nihw,oi->nohw", tap, w[:, :, ky, kx],
                                   precision=lax.Precision.HIGHEST)
    if norm == "instance":
        mean = jnp.mean(acc, axis=(2, 3), keepdims=True)
        var = jnp.mean(jnp.square(acc - mean), axis=(2, 3), keepdims=True)
        y = (acc - mean) / jnp.sqrt(var + EPS)
        y = y * gamma.reshape(1, -1, 1, 1) + beta.reshape(1, -1, 1, 1)
    else:
        y = acc
    return _activation(y, act)


if __name__ == "__main__":
    # Small shapes consistent with the module: NCHW input, 3x3 stride-2 conv.
    N, in_c, out_c, H, W = 2, 4, 8, 32, 32

    key = jax.random.PRNGKey(0)
    k = jax.random.split(key, 4)
    x = jax.random.normal(k[0], (N, in_c, H, W), jnp.float32)
    w = 0.2 * jax.random.normal(k[1], (out_c, in_c, 3, 3), jnp.float32)
    gamma = 1.0 + 0.1 * jax.random.normal(k[2], (out_c,), jnp.float32)
    beta = 0.1 * jax.random.normal(k[3], (out_c,), jnp.float32)

    out = conv3x3_forward(x, w, gamma, beta, stride=2, norm="instance", act="leakyrelu")
    out = jax.block_until_ready(out)

    ref = ref_forward(x, w, gamma, beta, stride=2, norm="instance", act="leakyrelu")
    assert out.shape == ref.shape == (N, out_c, H // 2, W // 2), out.shape
    max_err = float(jnp.max(jnp.abs(out - ref)))
    # tolerance leaves headroom for MXU f32-emulation rounding vs HIGHEST-precision ref;
    # any structural bug (wrong tap/stride/norm) produces errors orders of magnitude larger.
    assert max_err < 5e-3, f"mismatch vs reference: {max_err}"

    print("KERNEL_OK")
</pallas_src>

<mosaic_0001>
module attributes {stable_mosaic.version = 11 : i64} {
  func.func @_conv3x3_kernel(%arg0: i32, %arg1: memref<1x36x256xf32, #tpu.memory_space<vmem>>, %arg2: memref<8x36xf32, #tpu.memory_space<vmem>>, %arg3: memref<8x1xf32, #tpu.memory_space<vmem>>, %arg4: memref<8x1xf32, #tpu.memory_space<vmem>>, %arg5: memref<1x8x256xf32, #tpu.memory_space<vmem>>) attributes {dimension_semantics = [#tpu.dimension_semantics<parallel>], iteration_bounds = array<i64: 2>, scalar_prefetch = 0 : i64, scratch_operands = 0 : i64, tpu.core_type = #tpu.core_type<tc>, window_params = [{transform_indices = @transform_0, window_bounds = array<i64: 1, 36, 256>}, {pipeline_mode = #tpu.pipeline_mode<synchronous>, transform_indices = @transform_1, window_bounds = array<i64: 8, 36>}, {pipeline_mode = #tpu.pipeline_mode<synchronous>, transform_indices = @transform_2, window_bounds = array<i64: 8, 1>}, {pipeline_mode = #tpu.pipeline_mode<synchronous>, transform_indices = @transform_3, window_bounds = array<i64: 8, 1>}, {transform_indices = @transform_4, window_bounds = array<i64: 1, 8, 256>}]} {
    %c0 = arith.constant 0 : index
    %c0_0 = arith.constant 0 : index
    %0 = vector.load %arg2[%c0, %c0_0] : memref<8x36xf32, #tpu.memory_space<vmem>>, vector<8x36xf32>
    %c0_1 = arith.constant 0 : index
    %c0_2 = arith.constant 0 : index
    %c0_3 = arith.constant 0 : index
    %1 = vector.load %arg1[%c0_1, %c0_2, %c0_3] : memref<1x36x256xf32, #tpu.memory_space<vmem>>, vector<1x36x256xf32>
    %2 = vector.shape_cast %1 : vector<1x36x256xf32> to vector<36x256xf32>
    %cst = arith.constant dense<0.000000e+00> : vector<8x256xf32>
    %3 = tpu.matmul %0, %2, %cst {dimension_numbers = #tpu.dot_dimension_numbers<[1], [0], [0], [1], [0, 0, 1, 1], [], []>} : vector<8x36xf32>, vector<36x256xf32>, vector<8x256xf32> -> vector<8x256xf32>
    %cst_4 = arith.constant dense<0.000000e+00> : vector<8xf32>
    %4 = vector.multi_reduction <add>, %3, %cst_4 [1] : vector<8x256xf32> to vector<8xf32>
    %5 = vector.shape_cast %4 : vector<8xf32> to vector<8x1xf32>
    %cst_5 = arith.constant 2.560000e+02 : f32
    %6 = vector.broadcast %cst_5 : f32 to vector<8x1xf32>
    %7 = arith.divf %5, %6 : vector<8x1xf32>
    %8 = vector.broadcast %7 : vector<8x1xf32> to vector<8x256xf32>
    %9 = arith.subf %3, %8 : vector<8x256xf32>
    %10 = arith.mulf %9, %9 : vector<8x256xf32>
    %cst_6 = arith.constant dense<0.000000e+00> : vector<8xf32>
    %11 = vector.multi_reduction <add>, %10, %cst_6 [1] : vector<8x256xf32> to vector<8xf32>
    %12 = vector.shape_cast %11 : vector<8xf32> to vector<8x1xf32>
    %cst_7 = arith.constant 2.560000e+02 : f32
    %13 = vector.broadcast %cst_7 : f32 to vector<8x1xf32>
    %14 = arith.divf %12, %13 : vector<8x1xf32>
    %15 = vector.broadcast %7 : vector<8x1xf32> to vector<8x256xf32>
    %16 = arith.subf %3, %15 : vector<8x256xf32>
    %cst_8 = arith.constant 9.99999974E-6 : f32
    %17 = vector.broadcast %cst_8 : f32 to vector<8x1xf32>
    %18 = arith.addf %14, %17 : vector<8x1xf32>
    %19 = math.rsqrt %18 : vector<8x1xf32>
    %20 = vector.broadcast %19 : vector<8x1xf32> to vector<8x256xf32>
    %21 = arith.mulf %16, %20 : vector<8x256xf32>
    %c0_9 = arith.constant 0 : index
    %c0_10 = arith.constant 0 : index
    %22 = vector.load %arg3[%c0_9, %c0_10] : memref<8x1xf32, #tpu.memory_space<vmem>>, vector<8x1xf32>
    %23 = vector.broadcast %22 : vector<8x1xf32> to vector<8x256xf32>
    %24 = arith.mulf %21, %23 : vector<8x256xf32>
    %c0_11 = arith.constant 0 : index
    %c0_12 = arith.constant 0 : index
    %25 = vector.load %arg4[%c0_11, %c0_12] : memref<8x1xf32, #tpu.memory_space<vmem>>, vector<8x1xf32>
    %26 = vector.broadcast %25 : vector<8x1xf32> to vector<8x256xf32>
    %27 = arith.addf %24, %26 : vector<8x256xf32>
    %cst_13 = arith.constant 0.000000e+00 : f32
    %28 = vector.broadcast %cst_13 : f32 to vector<8x256xf32>
    %29 = arith.cmpf oge, %27, %28 : vector<8x256xf32>
    %cst_14 = arith.constant 1.000000e-01 : f32
    %30 = vector.broadcast %cst_14 : f32 to vector<8x256xf32>
    %31 = arith.mulf %30, %27 : vector<8x256xf32>
    %32 = arith.select %29, %27, %31 : vector<8x256xi1>, vector<8x256xf32>
    %c0_15 = arith.constant 0 : index
    %c0_16 = arith.constant 0 : index
    %c0_17 = arith.constant 0 : index
    %33 = vector.load %arg5[%c0_15, %c0_16, %c0_17] : memref<1x8x256xf32, #tpu.memory_space<vmem>>, vector<1x8x256xf32>
    %34 = vector.shape_cast %33 : vector<1x8x256xf32> to vector<8x256xf32>
    %35 = vector.shape_cast %32 : vector<8x256xf32> to vector<1x8x256xf32>
    tpu.vector_store %arg5[%c0_15, %c0_16, %c0_17], %35 {strides = array<i32>} : memref<1x8x256xf32, #tpu.memory_space<vmem>>, vector<1x8x256xf32>,
    return
  }
  func.func @transform_0(%arg0: i32) -> (i32, i32, i32) {
    %c0_i32 = arith.constant 0 : i32
    %c0_i32_0 = arith.constant 0 : i32
    %c0_i32_1 = arith.constant 0 : i32
    return %arg0, %c0_i32, %c0_i32_0 : i32, i32, i32
  }
  func.func @transform_1(%arg0: i32) -> (i32, i32) {
    %c0_i32 = arith.constant 0 : i32
    %c0_i32_0 = arith.constant 0 : i32
    %c0_i32_1 = arith.constant 0 : i32
    return %c0_i32, %c0_i32_0 : i32, i32
  }
  func.func @transform_2(%arg0: i32) -> (i32, i32) {
    %c0_i32 = arith.constant 0 : i32
    %c0_i32_0 = arith.constant 0 : i32
    %c0_i32_1 = arith.constant 0 : i32
    return %c0_i32, %c0_i32_0 : i32, i32
  }
  func.func @transform_3(%arg0: i32) -> (i32, i32) {
    %c0_i32 = arith.constant 0 : i32
    %c0_i32_0 = arith.constant 0 : i32
    %c0_i32_1 = arith.constant 0 : i32
    return %c0_i32, %c0_i32_0 : i32, i32
  }
  func.func @transform_4(%arg0: i32) -> (i32, i32, i32) {
    %c0_i32 = arith.constant 0 : i32
    %c0_i32_0 = arith.constant 0 : i32
    %c0_i32_1 = arith.constant 0 : i32
    return %arg0, %c0_i32, %c0_i32_0 : i32, i32, i32
  }
}

</mosaic_0001>

<llo_original>
// kernel: conv3x3_forward.1
$region0: #{conv3x3_forward.1}
  #allocation0 [shape = 'u32[]', space=smem, size = 0x4, offset = 0x4, fixed_abs, tag = 'smem constant byte address 0x4 - core index']
  #allocation1 [shape = 'u32[144,128]{1,0:T(1,128)}', space=vmem, size = 0x12000, scoped, tag = 'internal scratch']
  %s0 = inlined_call_operand.vmem [shape: f32[2,36,256], index: 0, kind: input, shape index: {}]
  %s1 = inlined_call_operand.vmem [shape: f32[8,36], index: 1, kind: input, shape index: {}]
  %s2 = inlined_call_operand.vmem [shape: f32[8,1], index: 2, kind: input, shape index: {}]
  %s3 = inlined_call_operand.vmem [shape: f32[8,1], index: 3, kind: input, shape index: {}]
  %s4 = inlined_call_operand.vmem [shape: f32[2,8,256], index: 4, kind: output, shape index: {}]
  %s5 = sld [smem:[#allocation0]]
  $region49: #{conv3x3_forward.1} parent=0
    _
  %s7 = ssub.s32 1, %s5
  %s8 = scalar_select 0, %s7, %s5
  loop: start=0, step=1, limit=4
  $region2: #{conv3x3_forward.1} parent=0 // loop_pre_header
    _
  $region3: #{conv3x3_forward.1} parent=0 // loop_header
    %s10 = sphi 0, %s14
    %p11 = scmp.ge.s32.totalorder %s10, 4
    %s20 = sphi 0, %s22
    %s23 = sphi 0, %s20
    %s24 = sphi 0, %s23
    %s40 = sphi 0, %s24
    %s44 = sphi 0, %s44
    %s46 = sphi 0, %s44
    %s47 = sphi 0, %s46
    %s61 = sphi 0, %s47
    %s65 = sphi 0, %s65
    %s67 = sphi 0, %s65
    %s68 = sphi 0, %s67
    %s82 = sphi 0, %s68
    %s86 = sphi 0, %s86
    %s88 = sphi 0, %s86
    %s89 = sphi 0, %s88
    %s103 = sphi 0, %s89
    %s109 = sphi 0, %s111
    %s112 = sphi 0, %s109
    %s113 = sphi 0, %s112
    %s129 = sphi 0, %s113
  $region4: #{conv3x3_forward.1} parent=0 // loop_header_branch
    %13 = sbr.rel (%p11) target = $region8
  $region5: #{conv3x3_forward.1} parent=0 // loop_body
    %s15 = ssub.s32 %s10, 1
    %s16 = ssub.s32 %s10, 2
    %s17 = sadd.s32 %s10, 1
    %s18 = ssub.s32 %s10, %s17
    %p19 = scmp.eq.s32.totalorder %s18, 0
    %s21 = sadd.s32 %s20, 1
    %s22 = scalar_select %p19, %s20, %s21
    %p25 = pneg %p19
    %p26 = scmp.eq.s32.totalorder %s10, 1
    %p27 = por %p25, %p26
    %p28 = scmp.ne.s32.totalorder %s20, %s23
    %p29 = scmp.eq.s32.totalorder %s10, 0
    %p30 = por %p28, %p29
    %p31 = scmp.ne.s32.totalorder %s20, %s23
    %p32 = scmp.eq.s32.totalorder %s15, 1
    %p33 = por %p31, %p32
    %p34 = scmp.ne.s32.totalorder %s23, %s24
    %p35 = scmp.eq.s32.totalorder %s15, 0
    %p36 = por %p34, %p35
    %p37 = scmp.ne.s32.totalorder %s23, %s24
    %p38 = scmp.eq.s32.totalorder %s16, 1
    %p39 = por %p37, %p38
    %p41 = scmp.ne.s32.totalorder %s24, %s40
    %p42 = scmp.eq.s32.totalorder %s16, 0
    %p43 = por %p41, %p42
    %s45 = sadd.s32 %s44, 1
    %p48 = scmp.eq.s32.totalorder %s10, 1
    %p49 = scmp.ne.s32.totalorder %s44, %s46
    %p50 = scmp.eq.s32.totalorder %s10, 0
    %p51 = por %p49, %p50
    %p52 = scmp.ne.s32.totalorder %s44, %s46
    %p53 = scmp.eq.s32.totalorder %s15, 1
    %p54 = por %p52, %p53
    %p55 = scmp.ne.s32.totalorder %s46, %s47
    %p56 = scmp.eq.s32.totalorder %s15, 0
    %p57 = por %p55, %p56
    %p58 = scmp.ne.s32.totalorder %s46, %s47
    %p59 = scmp.eq.s32.totalorder %s16, 1
    %p60 = por %p58, %p59
    %p62 = scmp.ne.s32.totalorder %s47, %s61
    %p63 = scmp.eq.s32.totalorder %s16, 0
    %p64 = por %p62, %p63
    %s66 = sadd.s32 %s65, 1
    %p69 = scmp.eq.s32.totalorder %s10, 1
    %p70 = scmp.ne.s32.totalorder %s65, %s67
    %p71 = scmp.eq.s32.totalorder %s10, 0
    %p72 = por %p70, %p71
    %p73 = scmp.ne.s32.totalorder %s65, %s67
    %p74 = scmp.eq.s32.totalorder %s15, 1
    %p75 = por %p73, %p74
    %p76 = scmp.ne.s32.totalorder %s67, %s68
    %p77 = scmp.eq.s32.totalorder %s15, 0
    %p78 = por %p76, %p77
    %p79 = scmp.ne.s32.totalorder %s67, %s68
    %p80 = scmp.eq.s32.totalorder %s16, 1
    %p81 = por %p79, %p80
    %p83 = scmp.ne.s32.totalorder %s68, %s82
    %p84 = scmp.eq.s32.totalorder %s16, 0
    %p85 = por %p83, %p84
    %s87 = sadd.s32 %s86, 1
    %p90 = scmp.eq.s32.totalorder %s10, 1
    %p91 = scmp.ne.s32.totalorder %s86, %s88
    %p92 = scmp.eq.s32.totalorder %s10, 0
    %p93 = por %p91, %p92
    %p94 = scmp.ne.s32.totalorder %s86, %s88
    %p95 = scmp.eq.s32.totalorder %s15, 1
    %p96 = por %p94, %p95
    %p97 = scmp.ne.s32.totalorder %s88, %s89
    %p98 = scmp.eq.s32.totalorder %s15, 0
    %p99 = por %p97, %p98
    %p100 = scmp.ne.s32.totalorder %s88, %s89
    %p101 = scmp.eq.s32.totalorder %s16, 1
    %p102 = por %p100, %p101
    %p104 = scmp.ne.s32.totalorder %s89, %s103
    %p105 = scmp.eq.s32.totalorder %s16, 0
    %p106 = por %p104, %p105
    %s107 = ssub.s32 %s10, %s17
    %p108 = scmp.eq.s32.totalorder %s107, 0
    %s110 = sadd.s32 %s109, 1
    %s111 = scalar_select %p108, %s109, %s110
    %p114 = pneg %p108
    %p115 = scmp.eq.s32.totalorder %s10, 1
    %p116 = por %p114, %p115
    %p117 = scmp.ne.s32.totalorder %s109, %s112
    %p118 = scmp.eq.s32.totalorder %s10, 0
    %p119 = por %p117, %p118
    %p120 = scmp.ne.s32.totalorder %s109, %s112
    %p121 = scmp.eq.s32.totalorder %s15, 1
    %p122 = por %p120, %p121
    %p123 = scmp.ne.s32.totalorder %s112, %s113
    %p124 = scmp.eq.s32.totalorder %s15, 0
    %p125 = por %p123, %p124
    %p126 = scmp.ne.s32.totalorder %s112, %s113
    %p127 = scmp.eq.s32.totalorder %s16, 1
    %p128 = por %p126, %p127
    %p130 = scmp.ne.s32.totalorder %s113, %s129
    %p131 = scmp.eq.s32.totalorder %s16, 0
    %p132 = por %p130, %p131
    %p133 = scmp.le.s32.totalorder 1, %s10
    %p134 = scmp.lt.s32.totalorder %s10, 3
    %p135 = pnand %p133, %p134
    %p136 = pneg %p135
    // Predicated region
    $region9: #{conv3x3_forward.1} parent=5 // pred_check
      _
    $region10: #{conv3x3_forward.1} parent=5 // pred_check_branch
      %138 = sbr.rel (%p135) target = $region12
    $region11: #{conv3x3_forward.1} parent=5 // pred_region
      %s139 = ssub.s32 %s10, 1
      // Predicated region
      $region13: #{conv3x3_forward.1} parent=11 // pred_check
        %p140 = pneg %p57
      $region14: #{conv3x3_forward.1} parent=11 // pred_check_branch
        %142 = sbr.rel (%p140) target = $region16
      $region15: #{conv3x3_forward.1} parent=11 // pred_region
        _
      $region16: #{conv3x3_forward.1} parent=11 // pred_fallthru
        _
      // Predicated region
      $region17: #{conv3x3_forward.1} parent=11 // pred_check
        %p143 = pneg %p78
      $region18: #{conv3x3_forward.1} parent=11 // pred_check_branch
        %145 = sbr.rel (%p143) target = $region20
      $region19: #{conv3x3_forward.1} parent=11 // pred_region
        _
      $region20: #{conv3x3_forward.1} parent=11 // pred_fallthru
        _
      // Predicated region
      $region21: #{conv3x3_forward.1} parent=11 // pred_check
        %p146 = pneg %p99
      $region22: #{conv3x3_forward.1} parent=11 // pred_check_branch
        %148 = sbr.rel (%p146) target = $region24
      $region23: #{conv3x3_forward.1} parent=11 // pred_region
        _
      $region24: #{conv3x3_forward.1} parent=11 // pred_fallthru
        _
    $region12: #{conv3x3_forward.1} parent=5 // pred_fallthru
      _
    %p149 = scmp.lt.s32.totalorder %s10, 2
    // Predicated region
    $region25: #{conv3x3_forward.1} parent=5 // pred_check
      %p150 = pneg %p149
    $region26: #{conv3x3_forward.1} parent=5 // pred_check_branch
      %152 = sbr.rel (%p150) target = $region28
    $region27: #{conv3x3_forward.1} parent=5 // pred_region
      // Predicated region
      $region29: #{conv3x3_forward.1} parent=27 // pred_check
        %p153 = pneg %p30
      $region30: #{conv3x3_forward.1} parent=27 // pred_check_branch
        %155 = sbr.rel (%p153) target = $region32
      $region31: #{conv3x3_forward.1} parent=27 // pred_region
        %p156 = scmp.lt.s32.totalorder %s10, 1
        %s157 = scalar_select %p156, %s10, 1
        %s158 = smul.addr %s157, 10
        %s159 = smul.addr %s158, 8
        %s160 = scalar_lea.vmem %s0, %s159
      $region32: #{conv3x3_forward.1} parent=27 // pred_fallthru
        _
    $region28: #{conv3x3_forward.1} parent=5 // pred_fallthru
      _
    %p161 = scmp.le.s32.totalorder 1, %s10
    %p162 = scmp.lt.s32.totalorder %s10, 3
    %p163 = pnand %p161, %p162
    %p164 = pneg %p163
    // Predicated region
    $region33: #{conv3x3_forward.1} parent=5 // pred_check
      _
    $region34: #{conv3x3_forward.1} parent=5 // pred_check_branch
      %166 = sbr.rel (%p163) target = $region36
    $region35: #{conv3x3_forward.1} parent=5 // pred_region
      %s167 = ssub.s32 %s10, 1
      %p168 = scmp.lt.s32.totalorder %s15, 1
      %s169 = scalar_select %p168, %s15, 1
      %s170 = smul.addr %s169, 10
      %s171 = smul.addr %s170, 8
      %s172 = scalar_lea.vmem %s0, %s171
      %p173 = pneg %p36
      %p174 = pneg %p33
      %p175 = pneg %p57
      %p176 = pneg %p54
      %p177 = pneg %p78
      %p178 = pneg %p75
      %p179 = pneg %p99
      %p180 = pneg %p96
      %p181 = pneg %p125
      %p182 = pneg %p122
      %p183 = scmp.lt.s32.totalorder %s15, 1
      %s184 = scalar_select %p183, %s15, 1
      %s185 = smul.addr %s184, 2
      %s186 = smul.addr %s185, 8
      %s187 = scalar_lea.vmem %s4, %s186
      %p188 = scmp.lt.s32.totalorder %s15, 1
      %s189 = scalar_select %p188, %s15, 1
      %s190 = smul.addr %s189, 10
      %s191 = smul.addr %s190, 8
      %s192 = scalar_lea.vmem %s0, %s191
      %p193 = scmp.lt.s32.totalorder %s15, 1
      %s194 = scalar_select %p193, %s15, 1
      %s195 = smul.addr %s194, 2
      %s196 = smul.addr %s195, 8
      %s197 = scalar_lea.vmem %s4, %s196
      %v198 = vld [vmem:[%s1] sm:$0xff]
      %v199 = vld [vmem:[%s192] sm:$0xff]
      %v200 = vld [vmem:[%s192 + $0x8] sm:$0xff]
      %v201 = vld [vmem:[%s192 + $0x10] sm:$0xff]
      %v202 = vld [vmem:[%s192 + $0x18] sm:$0xff]
      %v203 = vld [vmem:[%s192 + $0x20] sm:$0xff]
      %v204 = vld [vmem:[%s192 + $0x28] sm:$0xff]
      %v205 = vld [vmem:[%s192 + $0x30] sm:$0xff]
      %v206 = vld [vmem:[%s192 + $0x38] sm:$0xff]
      %v207 = vld [vmem:[%s192 + $0x40] sm:$0xf]
      %v208 = vld [vmem:[%s192 + $0x48] sm:$0xf]
      %vm209 = vcmask 293888
      %v211 = vsel %vm209, %v198, 0
      %vm213 = vcmask 1043456
      %v215 = vsel %vm213, %v207, 0
      %v218 = vsel %vm213, %v208, 0
      %220 = vmatprep.subr.mxu0 %v200
      %221 = vmatpush1.msra.mxu0 %v199
      %222 = vmatprep.subr.mxu0 %v202
      %223 = vmatpush1.msra.mxu0 %v201
      %224 = vmatprep.subr.mxu0 %v204
      %225 = vmatpush1.msra.mxu0 %v203
      %226 = vmatprep.subr.mxu0 %v206
      %227 = vmatpush1.msra.mxu0 %v205
      %228 = vmatprep.subr.mxu0 %v218
      %229 = vmatpush1.msra.mxu0 %v215
      %230 = vmatprep.subr.mxu0 0.0
      %231 = vmatpush1.msra.mxu0 0.0
      %232 = vmatprep.subr.mxu0 0.0
      %233 = vmatpush1.msra.mxu0 0.0
      %234 = vmatprep.subr.mxu0 0.0
      %235 = vmatpush1.msra.mxu0 0.0
      %236 = vmatprep.subr.mxu0 0.0
      %237 = vmatpush1.msra.mxu0 0.0
      %238 = vmatprep.subr.mxu0 0.0
      %239 = vmatpush1.msra.mxu0 0.0
      %240 = vmatprep.subr.mxu0 0.0
      %241 = vmatpush1.msra.mxu0 0.0
      %242 = vmatprep.subr.mxu0 0.0
      %243 = vmatpush1.msra.mxu0 0.0
      %244 = vmatprep.subr.mxu0 0.0
      %245 = vmatpush1.msra.mxu0 0.0
      %246 = vmatprep.subr.mxu0 0.0
      %247 = vmatpush1.msra.mxu0 0.0
      %248 = vmatprep.subr.mxu0 0.0
      %249 = vmatpush1.msra.mxu0 0.0
      %250 = vmatprep.subr.mxu0 0.0
      %251 = vmatpush1.msra.mxu0 0.0
      %252 = vmatprep.subr.mxu0 0.0
      %253 = vmatpush1.msra.mxu0 0.0
      %254 = vmatprep.subr.mxu0 0.0
      %255 = vmatpush1.msra.mxu0 0.0
      %256 = vmatprep.subr.mxu0 0.0
      %257 = vmatpush1.msra.mxu0 0.0
      %258 = vmatprep.subr.mxu0 0.0
      %259 = vmatpush1.msra.mxu0 0.0
      %260 = vmatprep.subr.mxu0 0.0
      %261 = vmatpush1.msra.mxu0 0.0
      %262 = vmatprep.subr.mxu0 0.0
      %263 = vmatpush1.msra.mxu0 0.0
      %264 = vmatprep.subr.mxu0 0.0
      %265 = vmatpush1.msra.mxu0 0.0
      %266 = vmatprep.subr.mxu0 0.0
      %267 = vmatpush1.msra.mxu0 0.0
      %268 = vmatprep.subr.mxu0 0.0
      %269 = vmatpush1.msra.mxu0 0.0
      %270 = vmatprep.subr.mxu0 0.0
      %271 = vmatpush1.msra.mxu0 0.0
      %272 = vmatprep.subr.mxu0 0.0
      %273 = vmatpush1.msra.mxu0 0.0
      %274 = vmatprep.subr.mxu0 0.0
      %275 = vmatpush1.msra.mxu0 0.0
      %276 = vmatprep.subr.mxu0 0.0
      %277 = vmatpush1.msra.mxu0 0.0
      %278 = vmatprep.subr.mxu0 0.0
      %279 = vmatpush1.msra.mxu0 0.0
      %280 = vmatprep.subr.mxu0 0.0
      %281 = vmatpush1.msra.mxu0 0.0
      %282 = vmatprep.subr.mxu0 0.0
      %283 = vmatpush1.msra.mxu0 0.0
      %284 = vmatprep.mubr.f32.mxu0 0.0
      %285 = vmatmul.mubr.f32.gmra.mrb[0].mxu0 %v211
      %v286 = vpop.f32.mrb[0].mxu0
      %v287 = vadd.f32 0.0, %v286
      %v288 = vpop.f32.mrb[0].mxu0
      %v289 = vadd.f32 0.0, %v288
      %290 = vdwg.mxu0
      %v291 = vadd.f32 %v287, %v289
      %292 = vadd.xlane.f32.xlu0 %v291
      %v293 = vpop.xlane.xlu0 %292
      %v294 = vrcp.pop 256.0
      %v295 = vmul.f32 %v293, %v294
      %v296 = vsub.f32 %v287, %v295
      %v297 = vsub.f32 %v289, %v295
      %v298 = vmul.f32 %v296, %v296
      %v299 = vmul.f32 %v297, %v297
      %v300 = vadd.f32 %v298, %v299
      %301 = vadd.xlane.f32.xlu0 %v300
      %v302 = vpop.xlane.xlu0 %301
      %v303 = vmul.f32 %v302, %v294
      %v304 = vadd.f32 %v303, 1e-05
      %v305 = vrsqrt.pop %v304
      %v306 = vmul.f32 %v296, %v305
      %v307 = vmul.f32 %v297, %v305
      %v308 = vld [vmem:[%s2] sm:$0xff]
      %310 = vset.pattern.permute.xlu0 0
      %311 = vperm.xlu0 %310, %v308
      %v312 = vpop.permute.xlu0 %311
      %v314 = vmul.f32 %v306, %v312
      %v315 = vmul.f32 %v307, %v312
      %v316 = vld [vmem:[%s3] sm:$0xff]
      %318 = vset.pattern.permute.xlu0 0
      %319 = vperm.xlu0 %318, %v316
      %v320 = vpop.permute.xlu0 %319
      %v322 = vadd.f32 %v314, %v320
      %v323 = vadd.f32 %v315, %v320
      %vm324 = vcmp.ge.f32.partialorder %v322, 0.0
      %vm325 = vcmp.ge.f32.partialorder %v323, 0.0
      %v326 = vmul.f32 %v322, 0.1
      %v327 = vmul.f32 %v323, 0.1
      %v328 = vsel %vm324, %v322, %v326
      %v329 = vsel %vm325, %v323, %v327
      %330 = vst [vmem:[%s197] sm:$0xff] %v328
      %331 = vst [vmem:[%s197 + $0x8] sm:$0xff] %v329
      %p332 = scmp.lt.s32.totalorder %s15, 1
      %s333 = scalar_select %p332, %s15, 1
      %s334 = smul.addr %s333, 2
      %s335 = smul.addr %s334, 8
      %s336 = scalar_lea.vmem %s4, %s335
      // Predicated region
      $region37: #{conv3x3_forward.1} parent=35 // pred_check
        %p337 = pneg %p122
      $region38: #{conv3x3_forward.1} parent=35 // pred_check_branch
        %339 = sbr.rel (%p337) target = $region40
      $region39: #{conv3x3_forward.1} parent=35 // pred_region
        _
      $region40: #{conv3x3_forward.1} parent=35 // pred_fallthru
        _
    $region36: #{conv3x3_forward.1} parent=5 // pred_fallthru
      _
    %p340 = scmp.le.s32.totalorder 2, %s10
    // Predicated region
    $region41: #{conv3x3_forward.1} parent=5 // pred_check
      %p341 = pneg %p340
    $region42: #{conv3x3_forward.1} parent=5 // pred_check_branch
      %343 = sbr.rel (%p341) target = $region44
    $region43: #{conv3x3_forward.1} parent=5 // pred_region
      %s344 = ssub.s32 %s10, 2
      // Predicated region
      $region45: #{conv3x3_forward.1} parent=43 // pred_check
        %p345 = pneg %p128
      $region46: #{conv3x3_forward.1} parent=43 // pred_check_branch
        %347 = sbr.rel (%p345) target = $region48
      $region47: #{conv3x3_forward.1} parent=43 // pred_region
        %p348 = scmp.lt.s32.totalorder %s16, 1
        %s349 = scalar_select %p348, %s16, 1
        %s350 = smul.addr %s349, 2
        %s351 = smul.addr %s350, 8
        %s352 = scalar_lea.vmem %s4, %s351
      $region48: #{conv3x3_forward.1} parent=43 // pred_fallthru
        _
    $region44: #{conv3x3_forward.1} parent=5 // pred_fallthru
      _
  $region6: #{conv3x3_forward.1} parent=0 // loop_footer
    %s14 = sadd.s32 1, %s10
  $region7: #{conv3x3_forward.1} parent=0 // loop_footer_branch
    %9 = sbr.rel target = $region3
  $region8: #{conv3x3_forward.1} parent=0 // loop_exit
    _

</llo_original>
